<compile_context>
chip_gen: v7x
topology: tpu7x:2x2x1
jax: 0.10.0
libtpu: 0.0.40
codegen_flags: <defaults>
</compile_context>

<pallas_src>
import functools

import jax
import jax.numpy as jnp
from jax.experimental import pallas as pl
from jax.experimental.pallas import tpu as pltpu


def _round_up(n, m):
    return ((n + m - 1) // m) * m


def _ceil_div(a, b):
    return -(-a // b)


def _mlp_kernel(x_ref, w1_ref, b1_ref, w2_ref, b2_ref,
                w3_ref, b3_ref, w4_ref, b4_ref, o_ref):
    # Layer 1: bf16 MXU inputs, f32 accumulate, f32 bias-add, ReLU on bf16
    # (ReLU commutes exactly with the downcast; the bf16 result feeds the
    # next MXU input with no extra cast).
    h = jnp.dot(x_ref[...].astype(jnp.bfloat16), w1_ref[...],
                preferred_element_type=jnp.float32)
    h = jnp.maximum((h + b1_ref[...]).astype(jnp.bfloat16), 0.0)

    # Layer 2
    h = jnp.dot(h, w2_ref[...], preferred_element_type=jnp.float32)
    h = jnp.maximum((h + b2_ref[...]).astype(jnp.bfloat16), 0.0)

    # Layer 3
    h = jnp.dot(h, w3_ref[...], preferred_element_type=jnp.float32)
    h = jnp.maximum((h + b3_ref[...]).astype(jnp.bfloat16), 0.0)

    # Layer 4 (no ReLU). Narrow (out_size-wide) store: block last dim equals
    # the full array dim, so this is a masked vst -- far fewer HBM bytes than
    # a 128-lane padded store for tiny out_size.
    h = jnp.dot(h, w4_ref[...], preferred_element_type=jnp.float32)
    o_ref[...] = (h + b4_ref[...]).astype(o_ref.dtype)


def _choose_batch_tile(B, b_tile):
    """Balanced batch tiles: avoid up-to-2x padding and, for B >= 16, force at
    least 2 grid steps so dimension_semantics=("parallel",) can shard the
    batch across both TensorCores on v7x."""
    if B >= 16:
        n_tiles = max(2, _ceil_div(B, b_tile))
    else:
        n_tiles = 1
    return _round_up(_ceil_div(B, n_tiles), 8)


@functools.partial(jax.jit, static_argnames=("b_tile",))
def neural_net_forward(x, params, *, b_tile=1024):
    """x: [B, input_size] float32.

    params: list of 4 tuples (W[in,out] bf16, b[1,out] f32).
    Returns [B, output_size] float32.
    """
    (w1, b1), (w2, b2), (w3, b3), (w4, b4) = params
    B, in_size = x.shape
    out_size = w4.shape[1]

    bt = _choose_batch_tile(B, b_tile)
    b_padded = _round_up(B, bt)
    if b_padded != B:
        x = jnp.pad(x, ((0, b_padded - B), (0, 0)))
    grid = (b_padded // bt,)

    # Weights/biases use constant index maps (full-array blocks) so they are
    # DMA'd once and stay VMEM-resident across grid steps (~133 KiB total).
    resident = lambda a: pl.BlockSpec(a.shape, lambda i: (0, 0))

    out = pl.pallas_call(
        _mlp_kernel,
        out_shape=jax.ShapeDtypeStruct((b_padded, out_size), jnp.float32),
        grid=grid,
        in_specs=[
            pl.BlockSpec((bt, in_size), lambda i: (i, 0)),   # x: batch-tiled
            resident(w1), resident(b1),
            resident(w2), resident(b2),
            resident(w3), resident(b3),
            resident(w4), resident(b4),
        ],
        out_specs=pl.BlockSpec((bt, out_size), lambda i: (i, 0)),
        compiler_params=pltpu.CompilerParams(
            # Batch axis is independent across steps -> shard across the two
            # TensorCores on v7x; harmless (1 TC) on v5e/v6e.
            dimension_semantics=("parallel",)),
    )(x, w1, b1, w2, b2, w3, b3, w4, b4)

    # Drop only the zero-padded batch rows (their garbage values never reach
    # the caller). No column slice needed anymore.
    return out[:B]


def init_params(key, input_size, output_size):
    """Mirror the PyTorch module's init:
    kaiming_normal_(weight, nonlinearity='relu') => std = sqrt(2 / fan_in);
    biases keep nn.Linear default: U(-1/sqrt(fan_in), 1/sqrt(fan_in)).
    Weights are stored [in, out] in bf16; biases [1, out] in f32."""
    dims = [input_size, 128, 256, 128, output_size]
    params = []
    for i in range(4):
        fan_in, fan_out = dims[i], dims[i + 1]
        key, kw, kb = jax.random.split(key, 3)
        w = (jax.random.normal(kw, (fan_in, fan_out), jnp.float32)
             * jnp.sqrt(2.0 / fan_in)).astype(jnp.bfloat16)
        bound = 1.0 / jnp.sqrt(fan_in)
        b = jax.random.uniform(kb, (1, fan_out), jnp.float32, -bound, bound)
        params.append((w, b))
    return params


def reference_forward(x, params):
    """Pure-JAX reference with the same numerics contract as the kernel:
    bf16 MXU inputs, f32 accumulation, f32 bias-add, ReLU (which commutes
    exactly with the bf16 downcast done before the next dot)."""
    h = x
    for i, (w, b) in enumerate(params):
        h = jnp.dot(h.astype(jnp.bfloat16), w,
                    preferred_element_type=jnp.float32) + b
        if i < 3:
            h = jnp.maximum(h, 0.0)
    return h


if __name__ == "__main__":
    INPUT_SIZE = 16
    OUTPUT_SIZE = 4

    key = jax.random.PRNGKey(0)
    key, kx1, kx2 = jax.random.split(key, 3)
    params = init_params(key, INPUT_SIZE, OUTPUT_SIZE)

    # Small batch (single grid step).
    x_small = jax.random.normal(kx1, (8, INPUT_SIZE), jnp.float32)
    out_small = jax.block_until_ready(neural_net_forward(x_small, params))
    ref_small = reference_forward(x_small, params)
    assert out_small.shape == (8, OUTPUT_SIZE), out_small.shape
    assert jnp.allclose(out_small, ref_small, atol=1e-3, rtol=1e-3), (
        float(jnp.max(jnp.abs(out_small - ref_small))))

    # Non-multiple batch: exercises balanced tiling (2 tiles of 264, pad 8)
    # and the masked-row slice.
    x_big = jax.random.normal(kx2, (520, INPUT_SIZE), jnp.float32)
    out_big = jax.block_until_ready(neural_net_forward(x_big, params))
    ref_big = reference_forward(x_big, params)
    assert out_big.shape == (520, OUTPUT_SIZE), out_big.shape
    assert jnp.allclose(out_big, ref_big, atol=1e-3, rtol=1e-3), (
        float(jnp.max(jnp.abs(out_big - ref_big))))

    print("KERNEL_OK")
</pallas_src>

<mosaic_0001>
module attributes {stable_mosaic.version = 11 : i64} {
  func.func @_mlp_kernel(%arg0: i32, %arg1: memref<8x16xf32, #tpu.memory_space<vmem>>, %arg2: memref<16x128xbf16, #tpu.memory_space<vmem>>, %arg3: memref<1x128xf32, #tpu.memory_space<vmem>>, %arg4: memref<128x256xbf16, #tpu.memory_space<vmem>>, %arg5: memref<1x256xf32, #tpu.memory_space<vmem>>, %arg6: memref<256x128xbf16, #tpu.memory_space<vmem>>, %arg7: memref<1x128xf32, #tpu.memory_space<vmem>>, %arg8: memref<128x4xbf16, #tpu.memory_space<vmem>>, %arg9: memref<1x4xf32, #tpu.memory_space<vmem>>, %arg10: memref<8x4xf32, #tpu.memory_space<vmem>>) attributes {dimension_semantics = [#tpu.dimension_semantics<parallel>], iteration_bounds = array<i64: 1>, scalar_prefetch = 0 : i64, scratch_operands = 0 : i64, tpu.core_type = #tpu.core_type<tc>, window_params = [{transform_indices = @transform_0, window_bounds = array<i64: 8, 16>}, {pipeline_mode = #tpu.pipeline_mode<synchronous>, transform_indices = @transform_1, window_bounds = array<i64: 16, 128>}, {pipeline_mode = #tpu.pipeline_mode<synchronous>, transform_indices = @transform_2, window_bounds = array<i64: 1, 128>}, {pipeline_mode = #tpu.pipeline_mode<synchronous>, transform_indices = @transform_3, window_bounds = array<i64: 128, 256>}, {pipeline_mode = #tpu.pipeline_mode<synchronous>, transform_indices = @transform_4, window_bounds = array<i64: 1, 256>}, {pipeline_mode = #tpu.pipeline_mode<synchronous>, transform_indices = @transform_5, window_bounds = array<i64: 256, 128>}, {pipeline_mode = #tpu.pipeline_mode<synchronous>, transform_indices = @transform_6, window_bounds = array<i64: 1, 128>}, {pipeline_mode = #tpu.pipeline_mode<synchronous>, transform_indices = @transform_7, window_bounds = array<i64: 128, 4>}, {pipeline_mode = #tpu.pipeline_mode<synchronous>, transform_indices = @transform_8, window_bounds = array<i64: 1, 4>}, {transform_indices = @transform_9, window_bounds = array<i64: 8, 4>}]} {
    %c0 = arith.constant 0 : index
    %c0_0 = arith.constant 0 : index
    %0 = vector.load %arg1[%c0, %c0_0] : memref<8x16xf32, #tpu.memory_space<vmem>>, vector<8x16xf32>
    %1 = arith.truncf %0 : vector<8x16xf32> to vector<8x16xbf16>
    %c0_1 = arith.constant 0 : index
    %c0_2 = arith.constant 0 : index
    %2 = vector.load %arg2[%c0_1, %c0_2] : memref<16x128xbf16, #tpu.memory_space<vmem>>, vector<16x128xbf16>
    %cst = arith.constant dense<0.000000e+00> : vector<8x128xf32>
    %3 = tpu.matmul %1, %2, %cst {dimension_numbers = #tpu.dot_dimension_numbers<[1], [0], [0], [1], [0, 0, 1, 1], [], []>} : vector<8x16xbf16>, vector<16x128xbf16>, vector<8x128xf32> -> vector<8x128xf32>
    %c0_3 = arith.constant 0 : index
    %c0_4 = arith.constant 0 : index
    %4 = vector.load %arg3[%c0_3, %c0_4] : memref<1x128xf32, #tpu.memory_space<vmem>>, vector<1x128xf32>
    %5 = vector.broadcast %4 : vector<1x128xf32> to vector<8x128xf32>
    %6 = arith.addf %3, %5 : vector<8x128xf32>
    %7 = arith.truncf %6 : vector<8x128xf32> to vector<8x128xbf16>
    %cst_5 = arith.constant 0.000000e+00 : bf16
    %8 = vector.broadcast %cst_5 : bf16 to vector<8x128xbf16>
    %9 = arith.maximumf %7, %8 : vector<8x128xbf16>
    %c0_6 = arith.constant 0 : index
    %c0_7 = arith.constant 0 : index
    %10 = vector.load %arg4[%c0_6, %c0_7] : memref<128x256xbf16, #tpu.memory_space<vmem>>, vector<128x256xbf16>
    %cst_8 = arith.constant dense<0.000000e+00> : vector<8x256xf32>
    %11 = tpu.matmul %9, %10, %cst_8 {dimension_numbers = #tpu.dot_dimension_numbers<[1], [0], [0], [1], [0, 0, 1, 1], [], []>} : vector<8x128xbf16>, vector<128x256xbf16>, vector<8x256xf32> -> vector<8x256xf32>
    %c0_9 = arith.constant 0 : index
    %c0_10 = arith.constant 0 : index
    %12 = vector.load %arg5[%c0_9, %c0_10] : memref<1x256xf32, #tpu.memory_space<vmem>>, vector<1x256xf32>
    %13 = vector.broadcast %12 : vector<1x256xf32> to vector<8x256xf32>
    %14 = arith.addf %11, %13 : vector<8x256xf32>
    %15 = arith.truncf %14 : vector<8x256xf32> to vector<8x256xbf16>
    %cst_11 = arith.constant 0.000000e+00 : bf16
    %16 = vector.broadcast %cst_11 : bf16 to vector<8x256xbf16>
    %17 = arith.maximumf %15, %16 : vector<8x256xbf16>
    %c0_12 = arith.constant 0 : index
    %c0_13 = arith.constant 0 : index
    %18 = vector.load %arg6[%c0_12, %c0_13] : memref<256x128xbf16, #tpu.memory_space<vmem>>, vector<256x128xbf16>
    %cst_14 = arith.constant dense<0.000000e+00> : vector<8x128xf32>
    %19 = tpu.matmul %17, %18, %cst_14 {dimension_numbers = #tpu.dot_dimension_numbers<[1], [0], [0], [1], [0, 0, 1, 1], [], []>} : vector<8x256xbf16>, vector<256x128xbf16>, vector<8x128xf32> -> vector<8x128xf32>
    %c0_15 = arith.constant 0 : index
    %c0_16 = arith.constant 0 : index
    %20 = vector.load %arg7[%c0_15, %c0_16] : memref<1x128xf32, #tpu.memory_space<vmem>>, vector<1x128xf32>
    %21 = vector.broadcast %20 : vector<1x128xf32> to vector<8x128xf32>
    %22 = arith.addf %19, %21 : vector<8x128xf32>
    %23 = arith.truncf %22 : vector<8x128xf32> to vector<8x128xbf16>
    %cst_17 = arith.constant 0.000000e+00 : bf16
    %24 = vector.broadcast %cst_17 : bf16 to vector<8x128xbf16>
    %25 = arith.maximumf %23, %24 : vector<8x128xbf16>
    %c0_18 = arith.constant 0 : index
    %c0_19 = arith.constant 0 : index
    %26 = vector.load %arg8[%c0_18, %c0_19] : memref<128x4xbf16, #tpu.memory_space<vmem>>, vector<128x4xbf16>
    %cst_20 = arith.constant dense<0.000000e+00> : vector<8x4xf32>
    %27 = tpu.matmul %25, %26, %cst_20 {dimension_numbers = #tpu.dot_dimension_numbers<[1], [0], [0], [1], [0, 0, 1, 1], [], []>} : vector<8x128xbf16>, vector<128x4xbf16>, vector<8x4xf32> -> vector<8x4xf32>
    %c0_21 = arith.constant 0 : index
    %c0_22 = arith.constant 0 : index
    %28 = vector.load %arg9[%c0_21, %c0_22] : memref<1x4xf32, #tpu.memory_space<vmem>>, vector<1x4xf32>
    %29 = vector.broadcast %28 : vector<1x4xf32> to vector<8x4xf32>
    %30 = arith.addf %27, %29 : vector<8x4xf32>
    %c0_23 = arith.constant 0 : index
    %c0_24 = arith.constant 0 : index
    %31 = vector.load %arg10[%c0_23, %c0_24] : memref<8x4xf32, #tpu.memory_space<vmem>>, vector<8x4xf32>
    tpu.vector_store %arg10[%c0_23, %c0_24], %30 {strides = array<i32>} : memref<8x4xf32, #tpu.memory_space<vmem>>, vector<8x4xf32>,
    return
  }
  func.func @transform_0(%arg0: i32) -> (i32, i32) {
    %c0_i32 = arith.constant 0 : i32
    %c0_i32_0 = arith.constant 0 : i32
    return %arg0, %c0_i32 : i32, i32
  }
  func.func @transform_1(%arg0: i32) -> (i32, i32) {
    %c0_i32 = arith.constant 0 : i32
    %c0_i32_0 = arith.constant 0 : i32
    %c0_i32_1 = arith.constant 0 : i32
    return %c0_i32, %c0_i32_0 : i32, i32
  }
  func.func @transform_2(%arg0: i32) -> (i32, i32) {
    %c0_i32 = arith.constant 0 : i32
    %c0_i32_0 = arith.constant 0 : i32
    %c0_i32_1 = arith.constant 0 : i32
    return %c0_i32, %c0_i32_0 : i32, i32
  }
  func.func @transform_3(%arg0: i32) -> (i32, i32) {
    %c0_i32 = arith.constant 0 : i32
    %c0_i32_0 = arith.constant 0 : i32
    %c0_i32_1 = arith.constant 0 : i32
    return %c0_i32, %c0_i32_0 : i32, i32
  }
  func.func @transform_4(%arg0: i32) -> (i32, i32) {
    %c0_i32 = arith.constant 0 : i32
    %c0_i32_0 = arith.constant 0 : i32
    %c0_i32_1 = arith.constant 0 : i32
    return %c0_i32, %c0_i32_0 : i32, i32
  }
  func.func @transform_5(%arg0: i32) -> (i32, i32) {
    %c0_i32 = arith.constant 0 : i32
    %c0_i32_0 = arith.constant 0 : i32
    %c0_i32_1 = arith.constant 0 : i32
    return %c0_i32, %c0_i32_0 : i32, i32
  }
  func.func @transform_6(%arg0: i32) -> (i32, i32) {
    %c0_i32 = arith.constant 0 : i32
    %c0_i32_0 = arith.constant 0 : i32
    %c0_i32_1 = arith.constant 0 : i32
    return %c0_i32, %c0_i32_0 : i32, i32
  }
  func.func @transform_7(%arg0: i32) -> (i32, i32) {
    %c0_i32 = arith.constant 0 : i32
    %c0_i32_0 = arith.constant 0 : i32
    %c0_i32_1 = arith.constant 0 : i32
    return %c0_i32, %c0_i32_0 : i32, i32
  }
  func.func @transform_8(%arg0: i32) -> (i32, i32) {
    %c0_i32 = arith.constant 0 : i32
    %c0_i32_0 = arith.constant 0 : i32
    %c0_i32_1 = arith.constant 0 : i32
    return %c0_i32, %c0_i32_0 : i32, i32
  }
  func.func @transform_9(%arg0: i32) -> (i32, i32) {
    %c0_i32 = arith.constant 0 : i32
    %c0_i32_0 = arith.constant 0 : i32
    return %arg0, %c0_i32 : i32, i32
  }
}

</mosaic_0001>

<llo_original>
// kernel: neural_net_forward.1
$region0: #{neural_net_forward.1}
  #allocation0 [shape = 'u32[]', space=smem, size = 0x4, offset = 0x4, fixed_abs, tag = 'smem constant byte address 0x4 - core index']
  #allocation1 [shape = 'u32[144,128]{1,0:T(1,128)}', space=vmem, size = 0x12000, scoped, tag = 'internal scratch']
  %s0 = inlined_call_operand.vmem [shape: f32[8,16], index: 0, kind: input, shape index: {}]
  %s1 = inlined_call_operand.vmem [shape: bf16[16,128], index: 1, kind: input, shape index: {}]
  %s2 = inlined_call_operand.vmem [shape: f32[1,128], index: 2, kind: input, shape index: {}]
  %s3 = inlined_call_operand.hbm [shape: bf16[128,256], index: 3, kind: input, shape index: {}]
  %s4 = inlined_call_operand.vmem [shape: f32[1,256], index: 4, kind: input, shape index: {}]
  %s5 = inlined_call_operand.hbm [shape: bf16[256,128], index: 5, kind: input, shape index: {}]
  %s6 = inlined_call_operand.vmem [shape: f32[1,128], index: 6, kind: input, shape index: {}]
  %s7 = inlined_call_operand.vmem [shape: bf16[128,4], index: 7, kind: input, shape index: {}]
  %s8 = inlined_call_operand.vmem [shape: f32[1,4], index: 8, kind: input, shape index: {}]
  %s9 = inlined_call_operand.vmem [shape: f32[8,4], index: 9, kind: output, shape index: {}]
  %s10 = sld [smem:[#allocation0]]
  $region54: #{neural_net_forward.1} parent=0
    _
  %s12 = ssub.s32 1, %s10
  %s13 = scalar_select 0, %s12, %s10
  $region1: #{neural_net_forward.1} parent=0
    #allocation2 [shape = 'u8[65536]{0}', space=vmem, size = 0x10000, scoped, tag = 'input window, operand 3, single buffered']
    #allocation3 [shape = 's32[1]{0}', space=sflag, size = 0x4, scoped, tag = 'scoped memory for neural_net_forward.1']
    #allocation4 [shape = 'u8[65536]{0}', space=vmem, size = 0x10000, scoped, tag = 'input window, operand 5, single buffered']
    #allocation5 [shape = 's32[1]{0}', space=sflag, size = 0x4, scoped, tag = 'scoped memory for neural_net_forward.1']
    %14 = vsyncpa [#allocation3], 0
    %15 = vsyncpa [#allocation5], 0
    // Predicated region
    $region2: #{neural_net_forward.1} parent=1 // pred_check
      _
    $region3: #{neural_net_forward.1} parent=1 // pred_check_branch
      %17 = sbr.rel (0) target = $region5
    $region4: #{neural_net_forward.1} parent=1 // pred_region
      _
    $region5: #{neural_net_forward.1} parent=1 // pred_fallthru
      _
    // Predicated region
    $region6: #{neural_net_forward.1} parent=1 // pred_check
      _
    $region7: #{neural_net_forward.1} parent=1 // pred_check_branch
      %19 = sbr.rel (0) target = $region9
    $region8: #{neural_net_forward.1} parent=1 // pred_region
      _
    $region9: #{neural_net_forward.1} parent=1 // pred_fallthru
      _
    // Predicated region
    $region10: #{neural_net_forward.1} parent=1 // pred_check
      _
    $region11: #{neural_net_forward.1} parent=1 // pred_check_branch
      %21 = sbr.rel (0) target = $region13
    $region12: #{neural_net_forward.1} parent=1 // pred_region
      _
    $region13: #{neural_net_forward.1} parent=1 // pred_fallthru
      _
    // Predicated region
    $region14: #{neural_net_forward.1} parent=1 // pred_check
      _
    $region15: #{neural_net_forward.1} parent=1 // pred_check_branch
      %23 = sbr.rel (0) target = $region17
    $region16: #{neural_net_forward.1} parent=1 // pred_region
      %s25 = ssub.s32 2048, 2048
      %26 = vsyncadd [#allocation3], %s25
      %s27 = sshll.u32 [#allocation2], 4
      %s28 = int_to_ptr.vmem [resolvable:$true] %s27
      %33 = dma.hbm_to_vmem [thread:$0]  %s3, 2048, %s28, [#allocation3], 128, 128, 8
    $region17: #{neural_net_forward.1} parent=1 // pred_fallthru
      _
    // Predicated region
    $region18: #{neural_net_forward.1} parent=1 // pred_check
      _
    $region19: #{neural_net_forward.1} parent=1 // pred_check_branch
      %35 = sbr.rel (0) target = $region21
    $region20: #{neural_net_forward.1} parent=1 // pred_region
      _
    $region21: #{neural_net_forward.1} parent=1 // pred_fallthru
      _
    // Predicated region
    $region22: #{neural_net_forward.1} parent=1 // pred_check
      _
    $region23: #{neural_net_forward.1} parent=1 // pred_check_branch
      %37 = sbr.rel (0) target = $region25
    $region24: #{neural_net_forward.1} parent=1 // pred_region
      %s39 = ssub.s32 2048, 2048
      %40 = vsyncadd [#allocation5], %s39
      %s41 = sshll.u32 [#allocation4], 4
      %s42 = int_to_ptr.vmem [resolvable:$true] %s41
      %47 = dma.hbm_to_vmem [thread:$0]  %s5, 2048, %s42, [#allocation5], 64, 64, 4
    $region25: #{neural_net_forward.1} parent=1 // pred_fallthru
      _
    // Predicated region
    $region26: #{neural_net_forward.1} parent=1 // pred_check
      _
    $region27: #{neural_net_forward.1} parent=1 // pred_check_branch
      %49 = sbr.rel (0) target = $region29
    $region28: #{neural_net_forward.1} parent=1 // pred_region
      _
    $region29: #{neural_net_forward.1} parent=1 // pred_fallthru
      _
    // Predicated region
    $region30: #{neural_net_forward.1} parent=1 // pred_check
      _
    $region31: #{neural_net_forward.1} parent=1 // pred_check_branch
      %51 = sbr.rel (0) target = $region33
    $region32: #{neural_net_forward.1} parent=1 // pred_region
      _
    $region33: #{neural_net_forward.1} parent=1 // pred_fallthru
      _
    // Predicated region
    $region34: #{neural_net_forward.1} parent=1 // pred_check
      _
    $region35: #{neural_net_forward.1} parent=1 // pred_check_branch
      %53 = sbr.rel (0) target = $region37
    $region36: #{neural_net_forward.1} parent=1 // pred_region
      _
    $region37: #{neural_net_forward.1} parent=1 // pred_fallthru
      _
    // Predicated region
    $region38: #{neural_net_forward.1} parent=1 // pred_check
      _
    $region39: #{neural_net_forward.1} parent=1 // pred_check_branch
      %55 = sbr.rel (0) target = $region41
    $region40: #{neural_net_forward.1} parent=1 // pred_region
      %56 = dma.done [#allocation3], 2048
    $region41: #{neural_net_forward.1} parent=1 // pred_fallthru
      _
    // Predicated region
    $region42: #{neural_net_forward.1} parent=1 // pred_check
      _
    $region43: #{neural_net_forward.1} parent=1 // pred_check_branch
      %58 = sbr.rel (0) target = $region45
    $region44: #{neural_net_forward.1} parent=1 // pred_region
      %59 = dma.done [#allocation5], 2048
    $region45: #{neural_net_forward.1} parent=1 // pred_fallthru
      _
    %v61 = vld [vmem:[%s0] sm:$0xff]
    %v62 = vpack.c.bf16 %v61, %v61
    %v63 = vld [vmem:[%s1] sm:$0xf]
    %v64 = vld [vmem:[%s1 + $0x4] sm:$0xf]
    %v65 = vld [vmem:[%s2] sm:$0x1]
    %v67 = vlaneseq
    %v68 = vshrl.u32 %v67, 7
    %v69 = vsub.s32 0, %v68
    %v70 = vrot.slane %v65, %v69
    %v74 = vunpack.c.l.b16 %v63
    %v75 = vunpack.c.l.b16 %v64
    %v76 = vpack.c.b16 %v75, %v74
    %vm78 = vcmask 130048
    %v80 = vsel %vm78, %v62, 0
    %82 = vmatprep.subr.bf16.mxu0 0
    %83 = vmatpush1.bf16.msra.mxu0 %v76
    %84 = vmatprep.subr.bf16.mxu0 0
    %85 = vmatpush1.bf16.msra.mxu0 0
    %86 = vmatprep.subr.bf16.mxu0 0
    %87 = vmatpush1.bf16.msra.mxu0 0
    %88 = vmatprep.subr.bf16.mxu0 0
    %89 = vmatpush1.bf16.msra.mxu0 0
    %90 = vmatprep.subr.bf16.mxu0 0
    %91 = vmatpush1.bf16.msra.mxu0 0
    %92 = vmatprep.subr.bf16.mxu0 0
    %93 = vmatpush1.bf16.msra.mxu0 0
    %94 = vmatprep.subr.bf16.mxu0 0
    %95 = vmatpush1.bf16.msra.mxu0 0
    %96 = vmatprep.subr.bf16.mxu0 0
    %97 = vmatpush1.bf16.msra.mxu0 0
    %98 = vmatprep.subr.bf16.mxu0 0
    %99 = vmatpush1.bf16.msra.mxu0 0
    %100 = vmatprep.subr.bf16.mxu0 0
    %101 = vmatpush1.bf16.msra.mxu0 0
    %102 = vmatprep.subr.bf16.mxu0 0
    %103 = vmatpush1.bf16.msra.mxu0 0
    %104 = vmatprep.subr.bf16.mxu0 0
    %105 = vmatpush1.bf16.msra.mxu0 0
    %106 = vmatprep.subr.bf16.mxu0 0
    %107 = vmatpush1.bf16.msra.mxu0 0
    %108 = vmatprep.subr.bf16.mxu0 0
    %109 = vmatpush1.bf16.msra.mxu0 0
    %110 = vmatprep.subr.bf16.mxu0 0
    %111 = vmatpush1.bf16.msra.mxu0 0
    %112 = vmatprep.subr.bf16.mxu0 0
    %113 = vmatpush1.bf16.msra.mxu0 0
    %114 = vmatprep.mubr.bf16.mxu0 0
    %115 = vmatmul.mubr.bf16.gmra.mrb[0].mxu0 %v80
    %v116 = vpop.f32.mrb[0].mxu0
    %v117 = vadd.f32 %v70, %v116
    %v118 = vpop.f32.mrb[0].mxu0
    %v119 = vpop.f32.mrb[0].mxu0
    %v120 = vpop.f32.mrb[0].mxu0
    %121 = vdwg.mxu0
    %v122 = vpack.c.bf16 %v117, %v117
    %v123 = vmax.bf16 %v122, 0
    %v124 = vld [vmem:[#allocation2] sm:$0xff]
    %v125 = vld [vmem:[#allocation2 + $0x8] sm:$0xff]
    %v126 = vld [vmem:[#allocation2 + $0x10] sm:$0xff]
    %v127 = vld [vmem:[#allocation2 + $0x18] sm:$0xff]
    %v128 = vld [vmem:[#allocation2 + $0x20] sm:$0xff]
    %v129 = vld [vmem:[#allocation2 + $0x28] sm:$0xff]
    %v130 = vld [vmem:[#allocation2 + $0x30] sm:$0xff]
    %v131 = vld [vmem:[#allocation2 + $0x38] sm:$0xff]
    %v132 = vld [vmem:[#allocation2 + $0x40] sm:$0xff]
    %v133 = vld [vmem:[#allocation2 + $0x48] sm:$0xff]
    %v134 = vld [vmem:[#allocation2 + $0x50] sm:$0xff]
    %v135 = vld [vmem:[#allocation2 + $0x58] sm:$0xff]
    %v136 = vld [vmem:[#allocation2 + $0x60] sm:$0xff]
    %v137 = vld [vmem:[#allocation2 + $0x68] sm:$0xff]
    %v138 = vld [vmem:[#allocation2 + $0x70] sm:$0xff]
    %v139 = vld [vmem:[#allocation2 + $0x78] sm:$0xff]
    %v140 = vld [vmem:[%s4] sm:$0x3]
    %v142 = vlaneseq
    %v143 = vshrl.u32 %v142, 7
    %v144 = vsub.s32 0, %v143
    %v145 = vrot.slane %v140, %v144
    %v146 = vlaneseq
    %v147 = vshrl.u32 %v146, 7
    %v148 = vsub.s32 1, %v147
    %v149 = vrot.slane %v140, %v148
    %v168 = vunpack.c.l.b16 %v124
    %v169 = vunpack.c.h.b16 %v124
    %v170 = vunpack.c.l.b16 %v125
    %v171 = vunpack.c.h.b16 %v125
    %v172 = vunpack.c.l.b16 %v126
    %v173 = vunpack.c.h.b16 %v126
    %v174 = vunpack.c.l.b16 %v127
    %v175 = vunpack.c.h.b16 %v127
    %v176 = vunpack.c.l.b16 %v128
    %v177 = vunpack.c.h.b16 %v128
    %v178 = vunpack.c.l.b16 %v129
    %v179 = vunpack.c.h.b16 %v129
    %v180 = vunpack.c.l.b16 %v130
    %v181 = vunpack.c.h.b16 %v130
    %v182 = vunpack.c.l.b16 %v131
    %v183 = vunpack.c.h.b16 %v131
    %v184 = vunpack.c.l.b16 %v132
    %v185 = vunpack.c.h.b16 %v132
    %v186 = vunpack.c.l.b16 %v133
    %v187 = vunpack.c.h.b16 %v133
    %v188 = vunpack.c.l.b16 %v134
    %v189 = vunpack.c.h.b16 %v134
    %v190 = vunpack.c.l.b16 %v135
    %v191 = vunpack.c.h.b16 %v135
    %v192 = vunpack.c.l.b16 %v136
    %v193 = vunpack.c.h.b16 %v136
    %v194 = vunpack.c.l.b16 %v137
    %v195 = vunpack.c.h.b16 %v137
    %v196 = vunpack.c.l.b16 %v138
    %v197 = vunpack.c.h.b16 %v138
    %v198 = vunpack.c.l.b16 %v139
    %v199 = vunpack.c.h.b16 %v139
    %v200 = vpack.c.b16 %v170, %v168
    %v201 = vpack.c.b16 %v171, %v169
    %v202 = vpack.c.b16 %v174, %v172
    %v203 = vpack.c.b16 %v175, %v173
    %v204 = vpack.c.b16 %v178, %v176
    %v205 = vpack.c.b16 %v179, %v177
    %v206 = vpack.c.b16 %v182, %v180
    %v207 = vpack.c.b16 %v183, %v181
    %v208 = vpack.c.b16 %v186, %v184
    %v209 = vpack.c.b16 %v187, %v185
    %v210 = vpack.c.b16 %v190, %v188
    %v211 = vpack.c.b16 %v191, %v189
    %v212 = vpack.c.b16 %v194, %v192
    %v213 = vpack.c.b16 %v195, %v193
    %v214 = vpack.c.b16 %v198, %v196
    %v215 = vpack.c.b16 %v199, %v197
    %232 = vmatprep.subr.bf16.mxu0 %v201
    %233 = vmatpush1.bf16.msra.mxu0 %v200
    %234 = vmatprep.subr.bf16.mxu0 %v203
    %235 = vmatpush1.bf16.msra.mxu0 %v202
    %236 = vmatprep.subr.bf16.mxu0 %v205
    %237 = vmatpush1.bf16.msra.mxu0 %v204
    %238 = vmatprep.subr.bf16.mxu0 %v207
    %239 = vmatpush1.bf16.msra.mxu0 %v206
    %240 = vmatprep.subr.bf16.mxu0 %v209
    %241 = vmatpush1.bf16.msra.mxu0 %v208
    %242 = vmatprep.subr.bf16.mxu0 %v211
    %243 = vmatpush1.bf16.msra.mxu0 %v210
    %244 = vmatprep.subr.bf16.mxu0 %v213
    %245 = vmatpush1.bf16.msra.mxu0 %v212
    %246 = vmatprep.subr.bf16.mxu0 %v215
    %247 = vmatpush1.bf16.msra.mxu0 %v214
    %248 = vmatprep.subr.bf16.mxu0 0
    %249 = vmatpush1.bf16.msra.mxu0 0
    %250 = vmatprep.subr.bf16.mxu0 0
    %251 = vmatpush1.bf16.msra.mxu0 0
    %252 = vmatprep.subr.bf16.mxu0 0
    %253 = vmatpush1.bf16.msra.mxu0 0
    %254 = vmatprep.subr.bf16.mxu0 0
    %255 = vmatpush1.bf16.msra.mxu0 0
    %256 = vmatprep.subr.bf16.mxu0 0
    %257 = vmatpush1.bf16.msra.mxu0 0
    %258 = vmatprep.subr.bf16.mxu0 0
    %259 = vmatpush1.bf16.msra.mxu0 0
    %260 = vmatprep.subr.bf16.mxu0 0
    %261 = vmatpush1.bf16.msra.mxu0 0
    %262 = vmatprep.subr.bf16.mxu0 0
    %263 = vmatpush1.bf16.msra.mxu0 0
    %264 = vmatprep.mubr.bf16.mxu0 0
    %265 = vmatmul.mubr.bf16.gmra.mrb[0].mxu0 %v123
    %v266 = vpop.f32.mrb[0].mxu0
    %v267 = vadd.f32 %v145, %v266
    %v268 = vpop.f32.mrb[0].mxu0
    %v269 = vadd.f32 %v149, %v268
    %v270 = vpop.f32.mrb[0].mxu0
    %v271 = vpop.f32.mrb[0].mxu0
    %272 = vdwg.mxu0
    %v273 = vpack.c.bf16 %v267, %v267
    %v274 = vpack.c.bf16 %v269, %v269
    %v275 = vmax.bf16 %v273, 0
    %v276 = vmax.bf16 %v274, 0
    %v277 = vld [vmem:[#allocation4] sm:$0xf]
    %v278 = vld [vmem:[#allocation4 + $0x4] sm:$0xf]
    %v279 = vld [vmem:[#allocation4 + $0x8] sm:$0xf]
    %v280 = vld [vmem:[#allocation4 + $0xc] sm:$0xf]
    %v281 = vld [vmem:[#allocation4 + $0x10] sm:$0xf]
    %v282 = vld [vmem:[#allocation4 + $0x14] sm:$0xf]
    %v283 = vld [vmem:[#allocation4 + $0x18] sm:$0xf]
    %v284 = vld [vmem:[#allocation4 + $0x1c] sm:$0xf]
    %v285 = vld [vmem:[#allocation4 + $0x20] sm:$0xf]
    %v286 = vld [vmem:[#allocation4 + $0x24] sm:$0xf]
    %v287 = vld [vmem:[#allocation4 + $0x28] sm:$0xf]
    %v288 = vld [vmem:[#allocation4 + $0x2c] sm:$0xf]
    %v289 = vld [vmem:[#allocation4 + $0x30] sm:$0xf]
    %v290 = vld [vmem:[#allocation4 + $0x34] sm:$0xf]
    %v291 = vld [vmem:[#allocation4 + $0x38] sm:$0xf]
    %v292 = vld [vmem:[#allocation4 + $0x3c] sm:$0xf]
    %v293 = vld [vmem:[#allocation4 + $0x40] sm:$0xf]
    %v294 = vld [vmem:[#allocation4 + $0x44] sm:$0xf]
    %v295 = vld [vmem:[#allocation4 + $0x48] sm:$0xf]
    %v296 = vld [vmem:[#allocation4 + $0x4c] sm:$0xf]
    %v297 = vld [vmem:[#allocation4 + $0x50] sm:$0xf]
    %v298 = vld [vmem:[#allocation4 + $0x54] sm:$0xf]
    %v299 = vld [vmem:[#allocation4 + $0x58] sm:$0xf]
    %v300 = vld [vmem:[#allocation4 + $0x5c] sm:$0xf]
    %v301 = vld [vmem:[#allocation4 + $0x60] sm:$0xf]
    %v302 = vld [vmem:[#allocation4 + $0x64] sm:$0xf]
    %v303 = vld [vmem:[#allocation4 + $0x68] sm:$0xf]
    %v304 = vld [vmem:[#allocation4 + $0x6c] sm:$0xf]
    %v305 = vld [vmem:[#allocation4 + $0x70] sm:$0xf]
    %v306 = vld [vmem:[#allocation4 + $0x74] sm:$0xf]
    %v307 = vld [vmem:[#allocation4 + $0x78] sm:$0xf]
    %v308 = vld [vmem:[#allocation4 + $0x7c] sm:$0xf]
    %v309 = vld [vmem:[%s6] sm:$0x1]
    %v311 = vlaneseq
    %v312 = vshrl.u32 %v311, 7
    %v313 = vsub.s32 0, %v312
    %v314 = vrot.slane %v309, %v313
    %v348 = vunpack.c.l.b16 %v277
    %v349 = vunpack.c.l.b16 %v278
    %v350 = vunpack.c.l.b16 %v279
    %v351 = vunpack.c.l.b16 %v280
    %v352 = vunpack.c.l.b16 %v281
    %v353 = vunpack.c.l.b16 %v282
    %v354 = vunpack.c.l.b16 %v283
    %v355 = vunpack.c.l.b16 %v284
    %v356 = vunpack.c.l.b16 %v285
    %v357 = vunpack.c.l.b16 %v286
    %v358 = vunpack.c.l.b16 %v287
    %v359 = vunpack.c.l.b16 %v288
    %v360 = vunpack.c.l.b16 %v289
    %v361 = vunpack.c.l.b16 %v290
    %v362 = vunpack.c.l.b16 %v291
    %v363 = vunpack.c.l.b16 %v292
    %v364 = vunpack.c.l.b16 %v293
    %v365 = vunpack.c.l.b16 %v294
    %v366 = vunpack.c.l.b16 %v295
    %v367 = vunpack.c.l.b16 %v296
    %v368 = vunpack.c.l.b16 %v297
    %v369 = vunpack.c.l.b16 %v298
    %v370 = vunpack.c.l.b16 %v299
    %v371 = vunpack.c.l.b16 %v300
    %v372 = vunpack.c.l.b16 %v301
    %v373 = vunpack.c.l.b16 %v302
    %v374 = vunpack.c.l.b16 %v303
    %v375 = vunpack.c.l.b16 %v304
    %v376 = vunpack.c.l.b16 %v305
    %v377 = vunpack.c.l.b16 %v306
    %v378 = vunpack.c.l.b16 %v307
    %v379 = vunpack.c.l.b16 %v308
    %v380 = vpack.c.b16 %v349, %v348
    %v381 = vpack.c.b16 %v351, %v350
    %v382 = vpack.c.b16 %v353, %v352
    %v383 = vpack.c.b16 %v355, %v354
    %v384 = vpack.c.b16 %v357, %v356
    %v385 = vpack.c.b16 %v359, %v358
    %v386 = vpack.c.b16 %v361, %v360
    %v387 = vpack.c.b16 %v363, %v362
    %v388 = vpack.c.b16 %v365, %v364
    %v389 = vpack.c.b16 %v367, %v366
    %v390 = vpack.c.b16 %v369, %v368
    %v391 = vpack.c.b16 %v371, %v370
    %v392 = vpack.c.b16 %v373, %v372
    %v393 = vpack.c.b16 %v375, %v374
    %v394 = vpack.c.b16 %v377, %v376
    %v395 = vpack.c.b16 %v379, %v378
    %412 = vmatprep.subr.bf16.mxu0 0
    %413 = vmatpush1.bf16.msra.mxu0 %v380
    %414 = vmatprep.subr.bf16.mxu0 0
    %415 = vmatpush1.bf16.msra.mxu0 %v381
    %416 = vmatprep.subr.bf16.mxu0 0
    %417 = vmatpush1.bf16.msra.mxu0 %v382
    %418 = vmatprep.subr.bf16.mxu0 0
    %419 = vmatpush1.bf16.msra.mxu0 %v383
    %420 = vmatprep.subr.bf16.mxu0 0
    %421 = vmatpush1.bf16.msra.mxu0 %v384
    %422 = vmatprep.subr.bf16.mxu0 0
    %423 = vmatpush1.bf16.msra.mxu0 %v385
    %424 = vmatprep.subr.bf16.mxu0 0
    %425 = vmatpush1.bf16.msra.mxu0 %v386
    %426 = vmatprep.subr.bf16.mxu0 0
    %427 = vmatpush1.bf16.msra.mxu0 %v387
    %428 = vmatprep.subr.bf16.mxu0 0
    %429 = vmatpush1.bf16.msra.mxu0 %v388
    %430 = vmatprep.subr.bf16.mxu0 0
    %431 = vmatpush1.bf16.msra.mxu0 %v389
    %432 = vmatprep.subr.bf16.mxu0 0
    %433 = vmatpush1.bf16.msra.mxu0 %v390
    %434 = vmatprep.subr.bf16.mxu0 0
    %435 = vmatpush1.bf16.msra.mxu0 %v391
    %436 = vmatprep.subr.bf16.mxu0 0
    %437 = vmatpush1.bf16.msra.mxu0 %v392
    %438 = vmatprep.subr.bf16.mxu0 0
    %439 = vmatpush1.bf16.msra.mxu0 %v393
    %440 = vmatprep.subr.bf16.mxu0 0
    %441 = vmatpush1.bf16.msra.mxu0 %v394
    %442 = vmatprep.subr.bf16.mxu0 0
    %443 = vmatpush1.bf16.msra.mxu0 %v395
    %444 = vmatprep.mubr.bf16.mxu0 %v276
    %445 = vmatmul.mubr.bf16.gmra.mrb[0].mxu0 %v275
    %v446 = vpop.f32.mrb[0].mxu0
    %v447 = vadd.f32 %v314, %v446
    %v448 = vpop.f32.mrb[0].mxu0
    %v449 = vpop.f32.mrb[0].mxu0
    %v450 = vpop.f32.mrb[0].mxu0
    %451 = vdwg.mxu0
    %v452 = vpack.c.bf16 %v447, %v447
    %v453 = vmax.bf16 %v452, 0
    %v454 = vld [vmem:[%s7] sm:$0xf]
    %v455 = vld [vmem:[%s7 + $0x4] sm:$0xf]
    %v456 = vld [vmem:[%s7 + $0x8] sm:$0xf]
    %v457 = vld [vmem:[%s7 + $0xc] sm:$0xf]
    %v458 = vld [vmem:[%s7 + $0x10] sm:$0xf]
    %v459 = vld [vmem:[%s7 + $0x14] sm:$0xf]
    %v460 = vld [vmem:[%s7 + $0x18] sm:$0xf]
    %v461 = vld [vmem:[%s7 + $0x1c] sm:$0xf]
    %v462 = vld [vmem:[%s7 + $0x20] sm:$0xf]
    %v463 = vld [vmem:[%s7 + $0x24] sm:$0xf]
    %v464 = vld [vmem:[%s7 + $0x28] sm:$0xf]
    %v465 = vld [vmem:[%s7 + $0x2c] sm:$0xf]
    %v466 = vld [vmem:[%s7 + $0x30] sm:$0xf]
    %v467 = vld [vmem:[%s7 + $0x34] sm:$0xf]
    %v468 = vld [vmem:[%s7 + $0x38] sm:$0xf]
    %v469 = vld [vmem:[%s7 + $0x3c] sm:$0xf]
    %v470 = vld [vmem:[%s8] sm:$0x1]
    %v472 = vlaneseq
    %v473 = vshrl.u32 %v472, 7
    %v474 = vsub.s32 0, %v473
    %v475 = vrot.slane %v470, %v474
    %v493 = vunpack.c.l.b16 %v454
    %v494 = vunpack.c.l.b16 %v455
    %v495 = vunpack.c.l.b16 %v456
    %v496 = vunpack.c.l.b16 %v457
    %v497 = vunpack.c.l.b16 %v458
    %v498 = vunpack.c.l.b16 %v459
    %v499 = vunpack.c.l.b16 %v460
    %v500 = vunpack.c.l.b16 %v461
    %v501 = vunpack.c.l.b16 %v462
    %v502 = vunpack.c.l.b16 %v463
    %v503 = vunpack.c.l.b16 %v464
    %v504 = vunpack.c.l.b16 %v465
    %v505 = vunpack.c.l.b16 %v466
    %v506 = vunpack.c.l.b16 %v467
    %v507 = vunpack.c.l.b16 %v468
    %v508 = vunpack.c.l.b16 %v469
    %v509 = vpack.c.b16 %v494, %v493
    %v510 = vpack.c.b16 %v496, %v495
    %v511 = vpack.c.b16 %v498, %v497
    %v512 = vpack.c.b16 %v500, %v499
    %v513 = vpack.c.b16 %v502, %v501
    %v514 = vpack.c.b16 %v504, %v503
    %v515 = vpack.c.b16 %v506, %v505
    %v516 = vpack.c.b16 %v508, %v507
    %525 = vmatprep.subr.bf16.mxu0 0
    %526 = vmatpush1.bf16.msra.mxu0 %v509
    %527 = vmatprep.subr.bf16.mxu0 0
    %528 = vmatpush1.bf16.msra.mxu0 %v510
    %529 = vmatprep.subr.bf16.mxu0 0
    %530 = vmatpush1.bf16.msra.mxu0 %v511
    %531 = vmatprep.subr.bf16.mxu0 0
    %532 = vmatpush1.bf16.msra.mxu0 %v512
    %533 = vmatprep.subr.bf16.mxu0 0
    %534 = vmatpush1.bf16.msra.mxu0 %v513
    %535 = vmatprep.subr.bf16.mxu0 0
    %536 = vmatpush1.bf16.msra.mxu0 %v514
    %537 = vmatprep.subr.bf16.mxu0 0
    %538 = vmatpush1.bf16.msra.mxu0 %v515
    %539 = vmatprep.subr.bf16.mxu0 0
    %540 = vmatpush1.bf16.msra.mxu0 %v516
    %541 = vmatprep.subr.bf16.mxu0 0
    %542 = vmatpush1.bf16.msra.mxu0 0
    %543 = vmatprep.subr.bf16.mxu0 0
    %544 = vmatpush1.bf16.msra.mxu0 0
    %545 = vmatprep.subr.bf16.mxu0 0
    %546 = vmatpush1.bf16.msra.mxu0 0
    %547 = vmatprep.subr.bf16.mxu0 0
    %548 = vmatpush1.bf16.msra.mxu0 0
    %549 = vmatprep.subr.bf16.mxu0 0
    %550 = vmatpush1.bf16.msra.mxu0 0
    %551 = vmatprep.subr.bf16.mxu0 0
    %552 = vmatpush1.bf16.msra.mxu0 0
    %553 = vmatprep.subr.bf16.mxu0 0
    %554 = vmatpush1.bf16.msra.mxu0 0
    %555 = vmatprep.subr.bf16.mxu0 0
    %556 = vmatpush1.bf16.msra.mxu0 0
    %557 = vmatprep.mubr.bf16.mxu0 0
    %558 = vmatmul.mubr.bf16.gmra.mrb[0].mxu0 %v453
    %v559 = vpop.f32.mrb[0].mxu0
    %v560 = vadd.f32 %v475, %v559
    %v561 = vpop.f32.mrb[0].mxu0
    %v562 = vpop.f32.mrb[0].mxu0
    %v563 = vpop.f32.mrb[0].mxu0
    %564 = vdwg.mxu0
    %vm565 = vcmask 31744
    %566 = vst.msk [vmem:[%s9] sm:$0xff] %vm565, %v560
    // Predicated region
    $region46: #{neural_net_forward.1} parent=1 // pred_check
      _
    $region47: #{neural_net_forward.1} parent=1 // pred_check_branch
      %568 = sbr.rel (0) target = $region49
    $region48: #{neural_net_forward.1} parent=1 // pred_region
      _
    $region49: #{neural_net_forward.1} parent=1 // pred_fallthru
      _
    // Predicated region
    $region50: #{neural_net_forward.1} parent=1 // pred_check
      _
    $region51: #{neural_net_forward.1} parent=1 // pred_check_branch
      %570 = sbr.rel (0) target = $region53
    $region52: #{neural_net_forward.1} parent=1 // pred_region
      _
    $region53: #{neural_net_forward.1} parent=1 // pred_fallthru
      _
    %571 = vsyncpa [#allocation3], 1
    %572 = vsyncpa [#allocation5], 1

</llo_original>
